<compile_context>
chip_gen: v6e
topology: v6e:2x2x1
jax: 0.10.0
libtpu: 0.0.40
codegen_flags: <defaults>
</compile_context>

<pallas_src>
import functools

import jax
import jax.numpy as jnp
from jax import lax
from jax.experimental import pallas as pl
from jax.experimental.pallas import tpu as pltpu

_LANES = 128


def _sum_of_loss_kernel(p_ref, t_ref, o_ref, *, rows, tile_rows, acc_rows,
                        tiles_per_core, need_mask):
    c = pl.program_id(0)   # per-core partial ("parallel")
    i = pl.program_id(1)   # reduction step within this core ("arbitrary")

    @pl.when(i == 0)
    def _init():
        o_ref[...] = jnp.zeros_like(o_ref)

    d = p_ref[...].astype(jnp.float32) - t_ref[...].astype(jnp.float32)

    def _accumulate(dd):
        # Fused contribution to (sum_sq + sum_abs); loss = sum(contrib)/N.
        contrib = dd * dd + jnp.abs(dd)                      # VPU only
        # Reduce whole (8,128) vregs into acc_rows//8 independent chains
        # (pure VALU adds, no XLU, better ILP across the 4 VALUs).
        o_ref[...] += contrib.reshape(
            tile_rows // acc_rows, acc_rows, _LANES).sum(axis=0)

    if need_mask:
        row0 = (c * tiles_per_core + i) * tile_rows
        is_partial = row0 + tile_rows > rows   # boundary or clamped OOB tile

        @pl.when(is_partial)
        def _masked():
            rid = lax.broadcasted_iota(jnp.int32, (tile_rows, _LANES), 0) + row0
            _accumulate(jnp.where(rid < rows, d, jnp.float32(0.0)))

        @pl.when(jnp.logical_not(is_partial))
        def _full():
            _accumulate(d)
    else:
        _accumulate(d)


def sum_of_loss(pred, target, *, tile_rows=4096, core_split=1):
    """pred, target: arrays of identical shape. Returns scalar f32 loss.

    core_split=2 splits the reduction across 2 TensorCores (v7x megacore).
    # TODO(synk): on v7x, switch the leading grid axis to pltpu.CORE_PARALLEL
    # (or pl.core_map) once verified that plain "parallel" doesn't shard.
    """
    assert pred.shape == target.shape
    total = pred.size
    itemsize = jnp.dtype(pred.dtype).itemsize
    # Packed-sublane granule: f32 -> 8, bf16 -> 16, int8/fp8 -> 32.
    sublane = 8 * max(1, 4 // max(1, itemsize))

    p = pred.reshape(-1)
    t = target.reshape(-1)

    # Largest 128-aligned prefix goes through the kernel; the <=127-element
    # tail is added with a tiny jnp expression (no full-array pad copy).
    main = (total // _LANES) * _LANES
    rem = total - main
    tail = jnp.float32(0.0)
    if rem:
        dt = p[main:].astype(jnp.float32) - t[main:].astype(jnp.float32)
        tail = jnp.sum(dt * dt + jnp.abs(dt))
    if main == 0:
        return tail / jnp.float32(total)

    rows = main // _LANES
    p2 = p[:main].reshape(rows, _LANES)
    t2 = t[:main].reshape(rows, _LANES)

    # Large, VMEM-friendly block (multiple of the packed-sublane granule,
    # capped at the data size). Default 4096 rows * 128 lanes * f32 = 2 MiB
    # per input block -> 8 MiB double-buffered: under every scoped default.
    tile_rows = max(sublane, (tile_rows // sublane) * sublane)
    max_tile = rows if rows % sublane == 0 else (rows // sublane + 1) * sublane
    tile_rows = min(tile_rows, max_tile)
    tiles = -(-rows // tile_rows)

    # Wider partial (8 independent vreg chains) when the tile allows it.
    acc_rows = 64 if (tile_rows % 64 == 0) else 8

    # Optional 2-way TensorCore split (only worth it on multi-TC chips).
    n_split = 2 if (core_split >= 2 and tiles >= 2) else 1
    tiles_per_core = -(-tiles // n_split)
    need_mask = (n_split * tiles_per_core * tile_rows) != rows

    def in_map(c, i):
        b = c * tiles_per_core + i
        return (jnp.minimum(b, tiles - 1), 0)   # clamp; OOB tiles are masked

    kernel = functools.partial(
        _sum_of_loss_kernel,
        rows=rows, tile_rows=tile_rows, acc_rows=acc_rows,
        tiles_per_core=tiles_per_core, need_mask=need_mask)

    out = pl.pallas_call(
        kernel,
        out_shape=jax.ShapeDtypeStruct((n_split * acc_rows, _LANES),
                                       jnp.float32),
        grid_spec=pltpu.PrefetchScalarGridSpec(
            num_scalar_prefetch=0,
            grid=(n_split, tiles_per_core),
            in_specs=[
                pl.BlockSpec((tile_rows, _LANES), in_map),
                pl.BlockSpec((tile_rows, _LANES), in_map),
            ],
            out_specs=pl.BlockSpec((acc_rows, _LANES), lambda c, i: (c, 0)),
        ),
        compiler_params=pltpu.CompilerParams(
            dimension_semantics=("parallel", "arbitrary"),
        ),
        cost_estimate=pl.CostEstimate(
            flops=5 * main,
            transcendentals=0,
            bytes_accessed=2 * main * itemsize
                           + n_split * acc_rows * _LANES * 4,
        ),
    )(p2, t2)

    # Single cross-lane reduction + normalization, outside the hot loop.
    return (jnp.sum(out) + tail) / jnp.float32(total)   # = MSE + L1


def _reference(pred, target):
    d = pred.astype(jnp.float32) - target.astype(jnp.float32)
    return jnp.mean(d * d) + jnp.mean(jnp.abs(d))


if __name__ == "__main__":
    key = jax.random.PRNGKey(0)
    k1, k2, k3, k4, k5, k6 = jax.random.split(key, 6)

    # NCHW inputs: B=2, C=4, H=16, W=16 (exactly-divisible, unmasked path).
    pred = jax.random.normal(k1, (2, 4, 16, 16), dtype=jnp.float32)
    target = jax.random.normal(k2, (2, 4, 16, 16), dtype=jnp.float32)
    out = jax.block_until_ready(sum_of_loss(pred, target))
    ref = _reference(pred, target)
    assert jnp.allclose(out, ref, rtol=1e-5, atol=1e-5), (out, ref)

    # Multi-tile + 2-way core split: exercises tile-index clamping and the
    # pl.when-gated boundary mask (full tiles take the unmasked path).
    pred2 = jax.random.normal(k3, (2, 4, 20, 16), dtype=jnp.float32)
    target2 = jax.random.normal(k4, (2, 4, 20, 16), dtype=jnp.float32)
    out2 = jax.block_until_ready(
        sum_of_loss(pred2, target2, tile_rows=8, core_split=2))
    ref2 = _reference(pred2, target2)
    assert jnp.allclose(out2, ref2, rtol=1e-5, atol=1e-5), (out2, ref2)

    # Non-multiple-of-128 element count: kernel prefix + jnp tail (no pad).
    pred3 = jax.random.normal(k5, (5, 131), dtype=jnp.float32)
    target3 = jax.random.normal(k6, (5, 131), dtype=jnp.float32)
    out3 = jax.block_until_ready(sum_of_loss(pred3, target3))
    ref3 = _reference(pred3, target3)
    assert jnp.allclose(out3, ref3, rtol=1e-5, atol=1e-5), (out3, ref3)

    # bf16 inputs: narrow-dtype read, in-register upcast, sublane granule 16.
    pred4 = jax.random.normal(k1, (2, 4, 16, 16), dtype=jnp.bfloat16)
    target4 = jax.random.normal(k2, (2, 4, 16, 16), dtype=jnp.bfloat16)
    out4 = jax.block_until_ready(sum_of_loss(pred4, target4))
    ref4 = _reference(pred4, target4)
    assert jnp.allclose(out4, ref4, rtol=1e-4, atol=1e-4), (out4, ref4)

    print("KERNEL_OK")
</pallas_src>

<mosaic_0001>
module attributes {stable_mosaic.version = 11 : i64} {
  func.func @_sum_of_loss_kernel(%arg0: i32, %arg1: i32, %arg2: memref<16x128xf32, #tpu.memory_space<vmem>>, %arg3: memref<16x128xf32, #tpu.memory_space<vmem>>, %arg4: memref<8x128xf32, #tpu.memory_space<vmem>>) attributes {dimension_semantics = [#tpu.dimension_semantics<parallel>, #tpu.dimension_semantics<arbitrary>], iteration_bounds = array<i64: 1, 1>, scalar_prefetch = 0 : i64, scratch_operands = 0 : i64, tpu.core_type = #tpu.core_type<tc>, window_params = [{transform_indices = @transform_0, window_bounds = array<i64: 16, 128>}, {transform_indices = @transform_1, window_bounds = array<i64: 16, 128>}, {transform_indices = @transform_2, window_bounds = array<i64: 8, 128>}]} {
    %c0_i32 = arith.constant 0 : i32
    %0 = arith.cmpi eq, %arg1, %c0_i32 : i32
    %1 = arith.extui %0 : i1 to i32
    %c0_i32_0 = arith.constant 0 : i32
    %2 = arith.cmpi ne, %1, %c0_i32_0 : i32
    scf.if %2 {
      %cst_8 = arith.constant 0.000000e+00 : f32
      %14 = vector.broadcast %cst_8 : f32 to vector<8x128xf32>
      %c0_9 = arith.constant 0 : index
      %c0_10 = arith.constant 0 : index
      %15 = vector.load %arg4[%c0_9, %c0_10] : memref<8x128xf32, #tpu.memory_space<vmem>>, vector<8x128xf32>
      tpu.vector_store %arg4[%c0_9, %c0_10], %14 {strides = array<i32>} : memref<8x128xf32, #tpu.memory_space<vmem>>, vector<8x128xf32>,
    } else {
    }
    %c0 = arith.constant 0 : index
    %c0_1 = arith.constant 0 : index
    %3 = vector.load %arg2[%c0, %c0_1] : memref<16x128xf32, #tpu.memory_space<vmem>>, vector<16x128xf32>
    %c0_2 = arith.constant 0 : index
    %c0_3 = arith.constant 0 : index
    %4 = vector.load %arg3[%c0_2, %c0_3] : memref<16x128xf32, #tpu.memory_space<vmem>>, vector<16x128xf32>
    %5 = arith.subf %3, %4 : vector<16x128xf32>
    %6 = arith.mulf %5, %5 : vector<16x128xf32>
    %7 = math.absf %5 : vector<16x128xf32>
    %8 = arith.addf %6, %7 : vector<16x128xf32>
    %c0_4 = arith.constant 0 : index
    %c0_5 = arith.constant 0 : index
    %9 = vector.load %arg4[%c0_4, %c0_5] : memref<8x128xf32, #tpu.memory_space<vmem>>, vector<8x128xf32>
    %10 = vector.shape_cast %8 : vector<16x128xf32> to vector<2x8x128xf32>
    %cst = arith.constant dense<0.000000e+00> : vector<8x128xf32>
    %11 = vector.multi_reduction <add>, %10, %cst [0] : vector<2x8x128xf32> to vector<8x128xf32>
    %12 = arith.addf %9, %11 : vector<8x128xf32>
    %c0_6 = arith.constant 0 : index
    %c0_7 = arith.constant 0 : index
    %13 = vector.load %arg4[%c0_6, %c0_7] : memref<8x128xf32, #tpu.memory_space<vmem>>, vector<8x128xf32>
    tpu.vector_store %arg4[%c0_6, %c0_7], %12 {strides = array<i32>} : memref<8x128xf32, #tpu.memory_space<vmem>>, vector<8x128xf32>,
    return
  }
  func.func @transform_0(%arg0: i32, %arg1: i32) -> (i32, i32) {
    %c1_i32 = arith.constant 1 : i32
    %0 = arith.muli %arg0, %c1_i32 : i32
    %1 = arith.addi %0, %arg1 : i32
    %c0_i32 = arith.constant 0 : i32
    %2 = arith.minsi %1, %c0_i32 : i32
    %c0_i32_0 = arith.constant 0 : i32
    %c0_i32_1 = arith.constant 0 : i32
    return %2, %c0_i32_0 : i32, i32
  }
  func.func @transform_1(%arg0: i32, %arg1: i32) -> (i32, i32) {
    %c1_i32 = arith.constant 1 : i32
    %0 = arith.muli %arg0, %c1_i32 : i32
    %1 = arith.addi %0, %arg1 : i32
    %c0_i32 = arith.constant 0 : i32
    %2 = arith.minsi %1, %c0_i32 : i32
    %c0_i32_0 = arith.constant 0 : i32
    %c0_i32_1 = arith.constant 0 : i32
    return %2, %c0_i32_0 : i32, i32
  }
  func.func @transform_2(%arg0: i32, %arg1: i32) -> (i32, i32) {
    %c0_i32 = arith.constant 0 : i32
    %c0_i32_0 = arith.constant 0 : i32
    return %arg0, %c0_i32 : i32, i32
  }
}

</mosaic_0001>

<llo_original>
// kernel: tpu_custom_call.1
$region0: #{tpu_custom_call.1}
  #allocation0 [shape = 'u32[]', space=smem, size = 0x4, offset = 0x4, fixed_abs, tag = 'smem constant byte address 0x4 - core index']
  #allocation1 [shape = 'u32[144,128]{1,0:T(1,128)}', space=vmem, size = 0x12000, scoped, tag = 'internal scratch']
  %s0 = inlined_call_operand.hbm [shape: f32[16,128], index: 0, kind: input, shape index: {}]
  %s1 = inlined_call_operand.hbm [shape: f32[16,128], index: 1, kind: input, shape index: {}]
  %s2 = inlined_call_operand.hbm [shape: f32[8,128], index: 2, kind: output, shape index: {}]
  %s3 = sld [smem:[#allocation0]]
  $region30: #{tpu_custom_call.1} parent=0
    _
  %s5 = ssub.s32 1, %s3
  %s6 = scalar_select 0, %s5, %s3
  $region1: #{tpu_custom_call.1} parent=0
    #allocation2 [shape = 'u8[8192]{0}', space=vmem, size = 0x2000, scoped, tag = 'input window, operand 0, single buffered']
    #allocation3 [shape = 's32[1]{0}', space=sflag, size = 0x4, scoped, tag = 'scoped memory for tpu_custom_call.1']
    #allocation4 [shape = 's32[1]{0}', space=sflag, size = 0x4, scoped, tag = 'scoped memory for tpu_custom_call.1']
    #allocation5 [shape = 'u8[8192]{0}', space=vmem, size = 0x2000, scoped, tag = 'input window, operand 1, single buffered']
    #allocation6 [shape = 's32[1]{0}', space=sflag, size = 0x4, scoped, tag = 'scoped memory for tpu_custom_call.1']
    #allocation7 [shape = 'u8[4096]{0}', space=vmem, size = 0x1000, scoped, tag = 'output window, operand 0, single buffered']
    %7 = vsyncpa [#allocation3], 0
    %8 = vsyncpa [#allocation6], 0
    %9 = vsyncpa [#allocation4], 0
    // Predicated region
    $region2: #{tpu_custom_call.1} parent=1 // pred_check
      _
    $region3: #{tpu_custom_call.1} parent=1 // pred_check_branch
      %11 = sbr.rel (0) target = $region5
    $region4: #{tpu_custom_call.1} parent=1 // pred_region
      %s12 = sadd.s32 0, 0
      %p13 = scmp.lt.s32.totalorder %s12, 0
      %s14 = scalar_select %p13, %s12, 0
      %s15 = smul.u32 2, %s14
      %s17 = ssub.s32 256, 256
      %18 = vsyncadd [#allocation3], %s17
      %s19 = smul.addr %s15, 128
      %s20 = scalar_lea.hbm %s0, %s19
      %s21 = sshll.u32 [#allocation2], 4
      %s22 = int_to_ptr.vmem [resolvable:$true] %s21
      %27 = dma.hbm_to_vmem [thread:$0]  %s20, 256, %s22, [#allocation3], 128, 128, 8
    $region5: #{tpu_custom_call.1} parent=1 // pred_fallthru
      _
    // Predicated region
    $region6: #{tpu_custom_call.1} parent=1 // pred_check
      _
    $region7: #{tpu_custom_call.1} parent=1 // pred_check_branch
      %29 = sbr.rel (0) target = $region9
    $region8: #{tpu_custom_call.1} parent=1 // pred_region
      %s30 = sadd.s32 0, 0
      %p31 = scmp.lt.s32.totalorder %s30, 0
      %s32 = scalar_select %p31, %s30, 0
      %s33 = smul.u32 2, %s32
      %s35 = ssub.s32 256, 256
      %36 = vsyncadd [#allocation6], %s35
      %s37 = smul.addr %s33, 128
      %s38 = scalar_lea.hbm %s1, %s37
      %s39 = sshll.u32 [#allocation5], 4
      %s40 = int_to_ptr.vmem [resolvable:$true] %s39
      %45 = dma.hbm_to_vmem [thread:$0]  %s38, 256, %s40, [#allocation6], 128, 128, 8
    $region9: #{tpu_custom_call.1} parent=1 // pred_fallthru
      _
    // Predicated region
    $region10: #{tpu_custom_call.1} parent=1 // pred_check
      _
    $region11: #{tpu_custom_call.1} parent=1 // pred_check_branch
      %47 = sbr.rel (0) target = $region13
    $region12: #{tpu_custom_call.1} parent=1 // pred_region
      %48 = dma.done [#allocation3], 256
    $region13: #{tpu_custom_call.1} parent=1 // pred_fallthru
      _
    // Predicated region
    $region14: #{tpu_custom_call.1} parent=1 // pred_check
      _
    $region15: #{tpu_custom_call.1} parent=1 // pred_check_branch
      %50 = sbr.rel (0) target = $region17
    $region16: #{tpu_custom_call.1} parent=1 // pred_region
      %51 = dma.done [#allocation6], 256
    $region17: #{tpu_custom_call.1} parent=1 // pred_fallthru
      _
    %s52 = sadd.s32 0, 0
    %p53 = scmp.lt.s32.totalorder %s52, 0
    %s54 = scalar_select %p53, %s52, 0
    %s55 = smul.u32 2, %s54
    %s56 = sadd.s32 0, 0
    %p57 = scmp.lt.s32.totalorder %s56, 0
    %s58 = scalar_select %p57, %s56, 0
    %s59 = smul.u32 2, %s58
    %p60 = scmp.eq.s32.totalorder 0, 0
    // Predicated region
    $region18: #{tpu_custom_call.1} parent=1 // pred_check
      %p61 = pneg %p60
    $region19: #{tpu_custom_call.1} parent=1 // pred_check_branch
      %63 = sbr.rel (%p61) target = $region21
    $region20: #{tpu_custom_call.1} parent=1 // pred_region
      %64 = vst [vmem:[#allocation7] sm:$0xff] 0.0
    $region21: #{tpu_custom_call.1} parent=1 // pred_fallthru
      _
    %v65 = vld [vmem:[#allocation2] sm:$0xff]
    %v66 = vld [vmem:[#allocation2 + $0x8] sm:$0xff]
    %v67 = vld [vmem:[#allocation5] sm:$0xff]
    %v68 = vld [vmem:[#allocation5 + $0x8] sm:$0xff]
    %v69 = vsub.f32 %v65, %v67
    %v70 = vsub.f32 %v66, %v68
    %v71 = vmul.f32 %v69, %v69
    %v72 = vmul.f32 %v70, %v70
    %v73 = vand.u32 2147483647, %v69
    %v74 = vand.u32 2147483647, %v70
    %v75 = vadd.f32 %v71, %v73
    %v76 = vadd.f32 %v72, %v74
    %v77 = vld [vmem:[#allocation7] sm:$0xff]
    %v78 = vadd.f32 %v75, %v76
    %v79 = vadd.f32 %v77, %v78
    %80 = vst [vmem:[#allocation7] sm:$0xff] %v79
    // Predicated region
    $region22: #{tpu_custom_call.1} parent=1 // pred_check
      _
    $region23: #{tpu_custom_call.1} parent=1 // pred_check_branch
      %82 = sbr.rel (0) target = $region25
    $region24: #{tpu_custom_call.1} parent=1 // pred_region
      %s84 = ssub.s32 128, 128
      %85 = vsyncadd [#allocation4], %s84
      %s87 = sshll.u32 [#allocation7], 4
      %s88 = int_to_ptr.vmem [resolvable:$true] %s87
      %90 = dma.vmem_to_hbm [thread:$0]  %s88, 128, %s2, [#allocation4]
    $region25: #{tpu_custom_call.1} parent=1 // pred_fallthru
      _
    // Predicated region
    $region26: #{tpu_custom_call.1} parent=1 // pred_check
      _
    $region27: #{tpu_custom_call.1} parent=1 // pred_check_branch
      %92 = sbr.rel (0) target = $region29
    $region28: #{tpu_custom_call.1} parent=1 // pred_region
      %93 = dma.done [#allocation4], 128
    $region29: #{tpu_custom_call.1} parent=1 // pred_fallthru
      _
    %94 = vsyncpa [#allocation3], 1
    %95 = vsyncpa [#allocation6], 1
    %96 = vsyncpa [#allocation4], 1

</llo_original>
